<compile_context>
chip_gen: v5e
topology: v5e:2x2
jax: 0.10.0
libtpu: 0.0.40
codegen_flags: <defaults>
</compile_context>

<pallas_src>
import functools

import jax
import jax.numpy as jnp
from jax.experimental import pallas as pl
from jax.experimental.pallas import tpu as pltpu


def _round_up(x, m):
    return ((x + m - 1) // m) * m


def _make_adjoint_kernel(tk):
    """Kernel for grid (j, k): x[:, j-tile] += y[:, k-tile] @ A[k-tile, j-tile].

    y_ref holds the *entire* (B, M_pad) measurement matrix (VMEM resident);
    a_ref holds one (tk, tn) tile of A; x_ref is the (B, tn) f32 output tile,
    resident across the k axis, used directly as the accumulator.
    """

    def kernel(y_ref, a_ref, x_ref):
        k = pl.program_id(1)

        @pl.when(k == 0)
        def _():
            x_ref[...] = jnp.zeros_like(x_ref)

        start = pl.multiple_of(k * tk, tk)
        y_blk = y_ref[:, pl.ds(start, tk)]          # (B, tk) bf16
        x_ref[...] += jnp.dot(
            y_blk, a_ref[...], preferred_element_type=jnp.float32
        )

    return kernel


@functools.partial(jax.jit, static_argnames=())
def pallas_adjoint_reconstruct(y, a):
    """x_hat = y @ a  (batched adjoint reconstruction) via a Pallas TPU kernel.

    y: (B, M) measurements (any float dtype; cast to bf16 for the MXU).
    a: (M, N) operator matrix A (x_hat = A^T y  <=>  y @ A row-vector form).
    returns (B, N) float32.
    """
    B, M = y.shape
    M2, N = a.shape
    assert M == M2, f"y has M={M} but A has M={M2}"

    # --- tile selection -----------------------------------------------------
    # Reduction axis (k over M): use a single big tile when M is modest.
    rk = _round_up(M, 128)
    tk = rk if rk <= 1024 else 512
    # Output lane axis (j over N): cap at 512 so N >= 1024 keeps >= 2 grid
    # points on the parallel axis (lets v7x's 2 TensorCores split the A stream).
    rn = _round_up(N, 128)
    tn = rn if rn <= 512 else 512

    M_pad = _round_up(M, tk)
    N_pad = _round_up(N, tn)

    # --- operand prep: bf16 stream for A, zero padding to tile multiples ----
    y_p = y.astype(jnp.bfloat16)
    a_p = a.astype(jnp.bfloat16)
    if M_pad != M:
        y_p = jnp.pad(y_p, ((0, 0), (0, M_pad - M)))
        a_p = jnp.pad(a_p, ((0, M_pad - M), (0, 0)))
    if N_pad != N:
        a_p = jnp.pad(a_p, ((0, 0), (0, N_pad - N)))

    grid = (N_pad // tn, M_pad // tk)  # reduction axis (k over M) is last

    out = pl.pallas_call(
        _make_adjoint_kernel(tk),
        out_shape=jax.ShapeDtypeStruct((B, N_pad), jnp.float32),
        grid_spec=pltpu.PrefetchScalarGridSpec(
            num_scalar_prefetch=0,
            grid=grid,
            in_specs=[
                # Whole y resident in VMEM (tiny), constant index_map -> no
                # redundant per-j re-DMA of the same y tile.
                pl.BlockSpec((B, M_pad), lambda j, k: (0, 0)),
                # Stream A tiles; this is the only real HBM traffic.
                pl.BlockSpec((tk, tn), lambda j, k: (k, j)),
            ],
            # Same block index across k -> output tile is VMEM-resident and
            # doubles as the f32 accumulator (no scratch needed).
            out_specs=pl.BlockSpec((B, tn), lambda j, k: (0, j)),
        ),
        compiler_params=pltpu.CompilerParams(
            dimension_semantics=("parallel", "arbitrary"),
        ),
    )(y_p, a_p)

    return out[:, :N] if N_pad != N else out


class PallasReconstructor:
    """Minimal concrete Reconstructor: x_hat = A^T y, computed in Pallas."""

    def __init__(self, img_shape, num_measurements, key):
        # img_shape = (C, H, W) — NCHW without batch.
        self.img_shape = img_shape
        C, H, W = img_shape
        self.n = C * H * W
        self.m = num_measurements
        # Deterministic "physics": random Gaussian measurement matrix A (M, N).
        a = jax.random.normal(key, (self.m, self.n), dtype=jnp.float32)
        a = a / jnp.sqrt(jnp.float32(self.m))
        # Store only the (M, N) operator the kernel consumes, in bf16
        # (the A stream is >99% of HBM bytes; accumulation stays f32).
        self.A = a.astype(jnp.bfloat16)

    def measure(self, x_nchw):
        """Forward model y = A x (plain JAX glue, NCHW flattened row-major)."""
        B = x_nchw.shape[0]
        x_flat = x_nchw.reshape(B, self.n).astype(jnp.bfloat16)
        return jnp.dot(x_flat, self.A.T, preferred_element_type=jnp.float32)

    def __call__(self, y, **kwargs):
        """x_hat = A^T y, reshaped back to NCHW."""
        B = y.shape[0]
        x_flat = pallas_adjoint_reconstruct(y, self.A)
        return x_flat.reshape((B,) + self.img_shape)


if __name__ == "__main__":
    key = jax.random.PRNGKey(0)
    k_phys, k_img = jax.random.split(key)

    B, C, H, W = 2, 4, 16, 16          # image shape (NCHW)
    M = 512                            # number of measurements

    model = PallasReconstructor((C, H, W), M, k_phys)

    # Synthetic ground-truth image and measurements y = A x.
    x_true = jax.random.normal(k_img, (B, C, H, W), dtype=jnp.float32)
    y = model.measure(x_true)          # (B, M), float32

    # Reconstruct: x_hat = model(y, physics)  (physics is held by the model).
    x_hat = model(y)
    x_hat = jax.block_until_ready(x_hat)

    # Pure-JAX reference with matching precision (bf16 operands, f32 accum).
    y_bf = y.astype(jnp.bfloat16)
    x_ref = jnp.dot(y_bf, model.A, preferred_element_type=jnp.float32)
    x_ref = x_ref.reshape(B, C, H, W)

    assert x_hat.shape == (B, C, H, W)
    assert jnp.allclose(x_hat, x_ref, atol=1e-2, rtol=1e-2), float(
        jnp.max(jnp.abs(x_hat - x_ref))
    )

    print("KERNEL_OK")
</pallas_src>

<mosaic_0001>
module attributes {stable_mosaic.version = 11 : i64} {
  func.func @kernel(%arg0: i32, %arg1: i32, %arg2: memref<2x512xbf16, #tpu.memory_space<vmem>>, %arg3: memref<512x512xbf16, #tpu.memory_space<vmem>>, %arg4: memref<2x512xf32, #tpu.memory_space<vmem>>) attributes {dimension_semantics = [#tpu.dimension_semantics<parallel>, #tpu.dimension_semantics<arbitrary>], iteration_bounds = array<i64: 2, 1>, scalar_prefetch = 0 : i64, scratch_operands = 0 : i64, tpu.core_type = #tpu.core_type<tc>, window_params = [{pipeline_mode = #tpu.pipeline_mode<synchronous>, transform_indices = @transform_0, window_bounds = array<i64: 2, 512>}, {transform_indices = @transform_1, window_bounds = array<i64: 512, 512>}, {transform_indices = @transform_2, window_bounds = array<i64: 2, 512>}]} {
    %c0_i32 = arith.constant 0 : i32
    %0 = arith.cmpi eq, %arg1, %c0_i32 : i32
    %1 = arith.extui %0 : i1 to i32
    %c0_i32_0 = arith.constant 0 : i32
    %2 = arith.cmpi ne, %1, %c0_i32_0 : i32
    scf.if %2 {
      %cst_7 = arith.constant 0.000000e+00 : f32
      %12 = vector.broadcast %cst_7 : f32 to vector<2x512xf32>
      %c0_8 = arith.constant 0 : index
      %c0_9 = arith.constant 0 : index
      %13 = vector.load %arg4[%c0_8, %c0_9] : memref<2x512xf32, #tpu.memory_space<vmem>>, vector<2x512xf32>
      tpu.vector_store %arg4[%c0_8, %c0_9], %12 {strides = array<i32>} : memref<2x512xf32, #tpu.memory_space<vmem>>, vector<2x512xf32>,
    } else {
    }
    %c512_i32 = arith.constant 512 : i32
    %3 = arith.muli %arg1, %c512_i32 : i32
    %4 = tpu.assume_multiple %3, 512 : i32
    %c0 = arith.constant 0 : index
    %5 = arith.index_cast %4 : i32 to index
    %6 = vector.load %arg2[%c0, %5] : memref<2x512xbf16, #tpu.memory_space<vmem>>, vector<2x512xbf16>
    %c0_1 = arith.constant 0 : index
    %c0_2 = arith.constant 0 : index
    %7 = vector.load %arg4[%c0_1, %c0_2] : memref<2x512xf32, #tpu.memory_space<vmem>>, vector<2x512xf32>
    %c0_3 = arith.constant 0 : index
    %c0_4 = arith.constant 0 : index
    %8 = vector.load %arg3[%c0_3, %c0_4] : memref<512x512xbf16, #tpu.memory_space<vmem>>, vector<512x512xbf16>
    %cst = arith.constant dense<0.000000e+00> : vector<2x512xf32>
    %9 = tpu.matmul %6, %8, %cst {dimension_numbers = #tpu.dot_dimension_numbers<[1], [0], [0], [1], [0, 0, 1, 1], [], []>} : vector<2x512xbf16>, vector<512x512xbf16>, vector<2x512xf32> -> vector<2x512xf32>
    %10 = arith.addf %7, %9 : vector<2x512xf32>
    %c0_5 = arith.constant 0 : index
    %c0_6 = arith.constant 0 : index
    %11 = vector.load %arg4[%c0_5, %c0_6] : memref<2x512xf32, #tpu.memory_space<vmem>>, vector<2x512xf32>
    tpu.vector_store %arg4[%c0_5, %c0_6], %10 {strides = array<i32>} : memref<2x512xf32, #tpu.memory_space<vmem>>, vector<2x512xf32>,
    return
  }
  func.func @transform_0(%arg0: i32, %arg1: i32) -> (i32, i32) {
    %c0_i32 = arith.constant 0 : i32
    %c0_i32_0 = arith.constant 0 : i32
    %c0_i32_1 = arith.constant 0 : i32
    return %c0_i32, %c0_i32_0 : i32, i32
  }
  func.func @transform_1(%arg0: i32, %arg1: i32) -> (i32, i32) {
    %c0_i32 = arith.constant 0 : i32
    return %arg1, %arg0 : i32, i32
  }
  func.func @transform_2(%arg0: i32, %arg1: i32) -> (i32, i32) {
    %c0_i32 = arith.constant 0 : i32
    %c0_i32_0 = arith.constant 0 : i32
    return %c0_i32, %arg0 : i32, i32
  }
}

</mosaic_0001>

<llo_original>
// kernel: pallas_adjoint_reconstruct.1
$region0: #{pallas_adjoint_reconstruct.1}
  #allocation0 [shape = 'u32[]', space=smem, size = 0x4, offset = 0x4, fixed_abs, tag = 'smem constant byte address 0x4 - core index']
  #allocation1 [shape = 'u32[72,128]{1,0:T(1,128)}', space=vmem, size = 0x9000, scoped, tag = 'internal scratch']
  %s0 = inlined_call_operand.vmem [shape: bf16[2,512], index: 0, kind: input, shape index: {}]
  %s1 = inlined_call_operand.hbm [shape: bf16[512,1024], index: 1, kind: input, shape index: {}]
  %s2 = inlined_call_operand.hbm [shape: f32[2,1024], index: 2, kind: output, shape index: {}]
  %s3 = sld [smem:[#allocation0]]
  $region49: #{pallas_adjoint_reconstruct.1} parent=0
    _
  %s5 = ssub.s32 1, %s3
  %s6 = scalar_select 0, %s5, %s3
  $region1: #{pallas_adjoint_reconstruct.1} parent=0
    #allocation2 [shape = 'u8[1048576]{0}', space=vmem, size = 0x100000, scoped, tag = 'input window, operand 1']
    #allocation3 [shape = 's32[2]{0}', space=sflag, size = 0x8, scoped, tag = 'scoped memory for pallas_adjoint_reconstruct.1']
    #allocation4 [shape = 's32[2]{0}', space=sflag, size = 0x8, scoped, tag = 'scoped memory for pallas_adjoint_reconstruct.1']
    #allocation5 [shape = 'u8[8192]{0}', space=vmem, size = 0x2000, scoped, tag = 'output window, operand 0']
    %7 = vsyncpa [#allocation3], 0
    %s8 = scalar_lea.sflag [#allocation3], 1
    %9 = vsyncpa %s8, 0
    %10 = vsyncpa [#allocation4], 0
    %s11 = scalar_lea.sflag [#allocation4], 1
    %12 = vsyncpa %s11, 0
    loop: start=0, step=1, limit=4
    $region2: #{pallas_adjoint_reconstruct.1} parent=1 // loop_pre_header
      _
    $region3: #{pallas_adjoint_reconstruct.1} parent=1 // loop_header
      %s14 = sphi 0, %s18
      %p15 = scmp.ge.s32.totalorder %s14, 4
      %s21 = sphi 0, %s33
      %s22 = sphi 0, %s29
      %s23 = sphi 0, %s21
      %s24 = sphi 0, %s22
      %s25 = sphi 0, %s23
      %s26 = sphi 0, %s24
      %s34 = sphi 0, %s34
      %s36 = sphi 0, %s34
      %s37 = sphi 0, %s36
      %s51 = sphi 0, %s37
      %s59 = sphi 0, %s61
      %s62 = sphi 0, %s59
      %s63 = sphi 0, %s62
      %s79 = sphi 0, %s63
      %s85 = sphi 0, %s87
      %s88 = sphi 0, %s85
      %s89 = sphi 0, %s88
      %s105 = sphi 0, %s89
    $region4: #{pallas_adjoint_reconstruct.1} parent=1 // loop_header_branch
      %17 = sbr.rel (%p15) target = $region8
    $region5: #{pallas_adjoint_reconstruct.1} parent=1 // loop_body
      %s19 = ssub.s32 %s14, 1
      %s20 = ssub.s32 %s14, 2
      %s27 = sadd.s32 1, %s22
      %p28 = scmp.ge.s32.totalorder %s27, 1
      %s29 = scalar_select %p28, 0, %s27
      %s30 = sadd.s32 1, %s21
      %s31 = scalar_select %p28, %s30, %s21
      %p32 = scmp.ge.s32.totalorder %s31, 2
      %s33 = scalar_select %p32, 0, %s31
      %s35 = sadd.s32 %s34, 1
      %p38 = scmp.eq.s32.totalorder %s14, 1
      %p39 = scmp.ne.s32.totalorder %s34, %s36
      %p40 = scmp.eq.s32.totalorder %s14, 0
      %p41 = por %p39, %p40
      %p42 = scmp.ne.s32.totalorder %s34, %s36
      %p43 = scmp.eq.s32.totalorder %s19, 1
      %p44 = por %p42, %p43
      %p45 = scmp.ne.s32.totalorder %s36, %s37
      %p46 = scmp.eq.s32.totalorder %s19, 0
      %p47 = por %p45, %p46
      %p48 = scmp.ne.s32.totalorder %s36, %s37
      %p49 = scmp.eq.s32.totalorder %s20, 1
      %p50 = por %p48, %p49
      %p52 = scmp.ne.s32.totalorder %s37, %s51
      %p53 = scmp.eq.s32.totalorder %s20, 0
      %p54 = por %p52, %p53
      %s55 = ssub.s32 %s22, %s29
      %s56 = ssub.s32 %s21, %s33
      %s57 = sor.u32 %s55, %s56
      %p58 = scmp.eq.s32.totalorder %s57, 0
      %s60 = sadd.s32 %s59, 1
      %s61 = scalar_select %p58, %s59, %s60
      %p64 = pneg %p58
      %p65 = scmp.eq.s32.totalorder %s14, 1
      %p66 = por %p64, %p65
      %p67 = scmp.ne.s32.totalorder %s59, %s62
      %p68 = scmp.eq.s32.totalorder %s14, 0
      %p69 = por %p67, %p68
      %p70 = scmp.ne.s32.totalorder %s59, %s62
      %p71 = scmp.eq.s32.totalorder %s19, 1
      %p72 = por %p70, %p71
      %p73 = scmp.ne.s32.totalorder %s62, %s63
      %p74 = scmp.eq.s32.totalorder %s19, 0
      %p75 = por %p73, %p74
      %p76 = scmp.ne.s32.totalorder %s62, %s63
      %p77 = scmp.eq.s32.totalorder %s20, 1
      %p78 = por %p76, %p77
      %p80 = scmp.ne.s32.totalorder %s63, %s79
      %p81 = scmp.eq.s32.totalorder %s20, 0
      %p82 = por %p80, %p81
      %s83 = ssub.s32 %s21, %s33
      %p84 = scmp.eq.s32.totalorder %s83, 0
      %s86 = sadd.s32 %s85, 1
      %s87 = scalar_select %p84, %s85, %s86
      %p90 = pneg %p84
      %p91 = scmp.eq.s32.totalorder %s14, 1
      %p92 = por %p90, %p91
      %p93 = scmp.ne.s32.totalorder %s85, %s88
      %p94 = scmp.eq.s32.totalorder %s14, 0
      %p95 = por %p93, %p94
      %p96 = scmp.ne.s32.totalorder %s85, %s88
      %p97 = scmp.eq.s32.totalorder %s19, 1
      %p98 = por %p96, %p97
      %p99 = scmp.ne.s32.totalorder %s88, %s89
      %p100 = scmp.eq.s32.totalorder %s19, 0
      %p101 = por %p99, %p100
      %p102 = scmp.ne.s32.totalorder %s88, %s89
      %p103 = scmp.eq.s32.totalorder %s20, 1
      %p104 = por %p102, %p103
      %p106 = scmp.ne.s32.totalorder %s89, %s105
      %p107 = scmp.eq.s32.totalorder %s20, 0
      %p108 = por %p106, %p107
      %p109 = scmp.le.s32.totalorder 1, %s14
      %p110 = scmp.lt.s32.totalorder %s14, 3
      %p111 = pnand %p109, %p110
      %p112 = pneg %p111
      // Predicated region
      $region9: #{pallas_adjoint_reconstruct.1} parent=5 // pred_check
        _
      $region10: #{pallas_adjoint_reconstruct.1} parent=5 // pred_check_branch
        %114 = sbr.rel (%p111) target = $region12
      $region11: #{pallas_adjoint_reconstruct.1} parent=5 // pred_region
        %s115 = ssub.s32 %s14, 1
        // Predicated region
        $region13: #{pallas_adjoint_reconstruct.1} parent=11 // pred_check
          %p116 = pneg %p47
        $region14: #{pallas_adjoint_reconstruct.1} parent=11 // pred_check_branch
          %118 = sbr.rel (%p116) target = $region16
        $region15: #{pallas_adjoint_reconstruct.1} parent=11 // pred_region
          _
        $region16: #{pallas_adjoint_reconstruct.1} parent=11 // pred_fallthru
          _
      $region12: #{pallas_adjoint_reconstruct.1} parent=5 // pred_fallthru
        _
      %p119 = scmp.lt.s32.totalorder %s14, 2
      // Predicated region
      $region17: #{pallas_adjoint_reconstruct.1} parent=5 // pred_check
        %p120 = pneg %p119
      $region18: #{pallas_adjoint_reconstruct.1} parent=5 // pred_check_branch
        %122 = sbr.rel (%p120) target = $region20
      $region19: #{pallas_adjoint_reconstruct.1} parent=5 // pred_region
        // Predicated region
        $region21: #{pallas_adjoint_reconstruct.1} parent=19 // pred_check
          %p123 = pneg %p69
        $region22: #{pallas_adjoint_reconstruct.1} parent=19 // pred_check_branch
          %125 = sbr.rel (%p123) target = $region24
        $region23: #{pallas_adjoint_reconstruct.1} parent=19 // pred_region
          %s126 = sand.u32 %s59, 1
          %s127 = scalar_lea.sflag [#allocation3], %s126
          %s128 = sand.u32 %s59, 1
          %s129 = smul.addr %s128, 1024
          %s130 = scalar_lea.vmem [#allocation2], %s129
          %s131 = smul.u32 64, %s22
          %s132 = smul.u32 4, %s21
          %134 = vsyncadd %s127, 0
          %s135 = smul.addr %s131, 8
          %s136 = sadd.s32 %s132, %s135
          %s137 = smul.addr %s136, 4
          %s138 = scalar_lea.hbm %s1, %s137
          %s139 = sshll.u32 %s138, 4
          %s140 = int_to_ptr.hbm [resolvable:$true] %s139
          %s141 = sshll.u32 %s130, 4
          %s142 = int_to_ptr.vmem [resolvable:$true] %s141
          %147 = dma.hbm_to_vmem [thread:$0]  %s140, 16384, %s142, %s127, 512, 256, 16
        $region24: #{pallas_adjoint_reconstruct.1} parent=19 // pred_fallthru
          _
      $region20: #{pallas_adjoint_reconstruct.1} parent=5 // pred_fallthru
        _
      %p148 = scmp.le.s32.totalorder 1, %s14
      %p149 = scmp.lt.s32.totalorder %s14, 3
      %p150 = pnand %p148, %p149
      %p151 = pneg %p150
      // Predicated region
      $region25: #{pallas_adjoint_reconstruct.1} parent=5 // pred_check
        _
      $region26: #{pallas_adjoint_reconstruct.1} parent=5 // pred_check_branch
        %153 = sbr.rel (%p150) target = $region28
      $region27: #{pallas_adjoint_reconstruct.1} parent=5 // pred_region
        %s154 = ssub.s32 %s14, 1
        %s155 = sand.u32 %s62, 1
        %s156 = scalar_lea.sflag [#allocation3], %s155
        %s157 = sand.u32 %s62, 1
        %s158 = smul.addr %s157, 1024
        %s159 = scalar_lea.vmem [#allocation2], %s158
        // Predicated region
        $region29: #{pallas_adjoint_reconstruct.1} parent=27 // pred_check
          %p160 = pneg %p75
        $region30: #{pallas_adjoint_reconstruct.1} parent=27 // pred_check_branch
          %162 = sbr.rel (%p160) target = $region32
        $region31: #{pallas_adjoint_reconstruct.1} parent=27 // pred_region
          %164 = dma.done %s156, 16384
        $region32: #{pallas_adjoint_reconstruct.1} parent=27 // pred_fallthru
          _
        %p165 = pneg %p47
        %p166 = pneg %p44
        %s167 = sand.u32 %s62, 1
        %s168 = scalar_lea.sflag [#allocation3], %s167
        %s169 = sand.u32 %s62, 1
        %s170 = smul.addr %s169, 1024
        %s171 = scalar_lea.vmem [#allocation2], %s170
        %p172 = pneg %p75
        %p173 = pneg %p72
        %p174 = pneg %p101
        %p175 = pneg %p98
        %s176 = sand.u32 %s88, 1
        %s177 = scalar_lea.sflag [#allocation4], %s176
        %s178 = sand.u32 %s88, 1
        %s179 = smul.addr %s178, 8
        %s180 = scalar_lea.vmem [#allocation5], %s179
        %s181 = smul.u32 64, %s24
        %s182 = smul.u32 4, %s23
        %s183 = smul.u32 4, %s23
        %p184 = scmp.eq.s32.totalorder %s24, 0
        // Predicated region
        $region33: #{pallas_adjoint_reconstruct.1} parent=27 // pred_check
          %p185 = pneg %p184
        $region34: #{pallas_adjoint_reconstruct.1} parent=27 // pred_check_branch
          %187 = sbr.rel (%p185) target = $region36
        $region35: #{pallas_adjoint_reconstruct.1} parent=27 // pred_region
          %188 = vst [vmem:[%s180] sm:$0xff] 0.0
        $region36: #{pallas_adjoint_reconstruct.1} parent=27 // pred_fallthru
          _
        %s189 = smul.u32 %s24, 512
        %s190 = sshra.s32 %s189, 7
        %s191 = sand.u32 %s189, 127
        %s192 = scalar_lea.vmem %s0, %s190
        %v193 = vld [vmem:[%s192] sm:$0xf]
        %v194 = vld [vmem:[%s180] sm:$0xff]
        %v195 = vld [vmem:[%s159] sm:$0xff]
        %v196 = vld [vmem:[%s159 + $0x8] sm:$0xff]
        %v197 = vld [vmem:[%s159 + $0x10] sm:$0xff]
        %v198 = vld [vmem:[%s159 + $0x18] sm:$0xff]
        %v199 = vld [vmem:[%s159 + $0x20] sm:$0xff]
        %v200 = vld [vmem:[%s159 + $0x28] sm:$0xff]
        %v201 = vld [vmem:[%s159 + $0x30] sm:$0xff]
        %v202 = vld [vmem:[%s159 + $0x38] sm:$0xff]
        %v203 = vld [vmem:[%s159 + $0x40] sm:$0xff]
        %v204 = vld [vmem:[%s159 + $0x48] sm:$0xff]
        %v205 = vld [vmem:[%s159 + $0x50] sm:$0xff]
        %v206 = vld [vmem:[%s159 + $0x58] sm:$0xff]
        %v207 = vld [vmem:[%s159 + $0x60] sm:$0xff]
        %v208 = vld [vmem:[%s159 + $0x68] sm:$0xff]
        %v209 = vld [vmem:[%s159 + $0x70] sm:$0xff]
        %v210 = vld [vmem:[%s159 + $0x78] sm:$0xff]
        %v211 = vld [vmem:[%s159 + $0x80] sm:$0xff]
        %v212 = vld [vmem:[%s159 + $0x88] sm:$0xff]
        %v213 = vld [vmem:[%s159 + $0x90] sm:$0xff]
        %v214 = vld [vmem:[%s159 + $0x98] sm:$0xff]
        %v215 = vld [vmem:[%s159 + $0xa0] sm:$0xff]
        %v216 = vld [vmem:[%s159 + $0xa8] sm:$0xff]
        %v217 = vld [vmem:[%s159 + $0xb0] sm:$0xff]
        %v218 = vld [vmem:[%s159 + $0xb8] sm:$0xff]
        %v219 = vld [vmem:[%s159 + $0xc0] sm:$0xff]
        %v220 = vld [vmem:[%s159 + $0xc8] sm:$0xff]
        %v221 = vld [vmem:[%s159 + $0xd0] sm:$0xff]
        %v222 = vld [vmem:[%s159 + $0xd8] sm:$0xff]
        %v223 = vld [vmem:[%s159 + $0xe0] sm:$0xff]
        %v224 = vld [vmem:[%s159 + $0xe8] sm:$0xff]
        %v225 = vld [vmem:[%s159 + $0xf0] sm:$0xff]
        %v226 = vld [vmem:[%s159 + $0xf8] sm:$0xff]
        %v227 = vld [vmem:[%s159 + $0x100] sm:$0xff]
        %v228 = vld [vmem:[%s159 + $0x108] sm:$0xff]
        %v229 = vld [vmem:[%s159 + $0x110] sm:$0xff]
        %v230 = vld [vmem:[%s159 + $0x118] sm:$0xff]
        %v231 = vld [vmem:[%s159 + $0x120] sm:$0xff]
        %v232 = vld [vmem:[%s159 + $0x128] sm:$0xff]
        %v233 = vld [vmem:[%s159 + $0x130] sm:$0xff]
        %v234 = vld [vmem:[%s159 + $0x138] sm:$0xff]
        %v235 = vld [vmem:[%s159 + $0x140] sm:$0xff]
        %v236 = vld [vmem:[%s159 + $0x148] sm:$0xff]
        %v237 = vld [vmem:[%s159 + $0x150] sm:$0xff]
        %v238 = vld [vmem:[%s159 + $0x158] sm:$0xff]
        %v239 = vld [vmem:[%s159 + $0x160] sm:$0xff]
        %v240 = vld [vmem:[%s159 + $0x168] sm:$0xff]
        %v241 = vld [vmem:[%s159 + $0x170] sm:$0xff]
        %v242 = vld [vmem:[%s159 + $0x178] sm:$0xff]
        %v243 = vld [vmem:[%s159 + $0x180] sm:$0xff]
        %v244 = vld [vmem:[%s159 + $0x188] sm:$0xff]
        %v245 = vld [vmem:[%s159 + $0x190] sm:$0xff]
        %v246 = vld [vmem:[%s159 + $0x198] sm:$0xff]
        %v247 = vld [vmem:[%s159 + $0x1a0] sm:$0xff]
        %v248 = vld [vmem:[%s159 + $0x1a8] sm:$0xff]
        %v249 = vld [vmem:[%s159 + $0x1b0] sm:$0xff]
        %v250 = vld [vmem:[%s159 + $0x1b8] sm:$0xff]
        %v251 = vld [vmem:[%s159 + $0x1c0] sm:$0xff]
        %v252 = vld [vmem:[%s159 + $0x1c8] sm:$0xff]
        %v253 = vld [vmem:[%s159 + $0x1d0] sm:$0xff]
        %v254 = vld [vmem:[%s159 + $0x1d8] sm:$0xff]
        %v255 = vld [vmem:[%s159 + $0x1e0] sm:$0xff]
        %v256 = vld [vmem:[%s159 + $0x1e8] sm:$0xff]
        %v257 = vld [vmem:[%s159 + $0x1f0] sm:$0xff]
        %v258 = vld [vmem:[%s159 + $0x1f8] sm:$0xff]
        %v259 = vld [vmem:[%s159 + $0x200] sm:$0xff]
        %v260 = vld [vmem:[%s159 + $0x208] sm:$0xff]
        %v261 = vld [vmem:[%s159 + $0x210] sm:$0xff]
        %v262 = vld [vmem:[%s159 + $0x218] sm:$0xff]
        %v263 = vld [vmem:[%s159 + $0x220] sm:$0xff]
        %v264 = vld [vmem:[%s159 + $0x228] sm:$0xff]
        %v265 = vld [vmem:[%s159 + $0x230] sm:$0xff]
        %v266 = vld [vmem:[%s159 + $0x238] sm:$0xff]
        %v267 = vld [vmem:[%s159 + $0x240] sm:$0xff]
        %v268 = vld [vmem:[%s159 + $0x248] sm:$0xff]
        %v269 = vld [vmem:[%s159 + $0x250] sm:$0xff]
        %v270 = vld [vmem:[%s159 + $0x258] sm:$0xff]
        %v271 = vld [vmem:[%s159 + $0x260] sm:$0xff]
        %v272 = vld [vmem:[%s159 + $0x268] sm:$0xff]
        %v273 = vld [vmem:[%s159 + $0x270] sm:$0xff]
        %v274 = vld [vmem:[%s159 + $0x278] sm:$0xff]
        %v275 = vld [vmem:[%s159 + $0x280] sm:$0xff]
        %v276 = vld [vmem:[%s159 + $0x288] sm:$0xff]
        %v277 = vld [vmem:[%s159 + $0x290] sm:$0xff]
        %v278 = vld [vmem:[%s159 + $0x298] sm:$0xff]
        %v279 = vld [vmem:[%s159 + $0x2a0] sm:$0xff]
        %v280 = vld [vmem:[%s159 + $0x2a8] sm:$0xff]
        %v281 = vld [vmem:[%s159 + $0x2b0] sm:$0xff]
        %v282 = vld [vmem:[%s159 + $0x2b8] sm:$0xff]
        %v283 = vld [vmem:[%s159 + $0x2c0] sm:$0xff]
        %v284 = vld [vmem:[%s159 + $0x2c8] sm:$0xff]
        %v285 = vld [vmem:[%s159 + $0x2d0] sm:$0xff]
        %v286 = vld [vmem:[%s159 + $0x2d8] sm:$0xff]
        %v287 = vld [vmem:[%s159 + $0x2e0] sm:$0xff]
        %v288 = vld [vmem:[%s159 + $0x2e8] sm:$0xff]
        %v289 = vld [vmem:[%s159 + $0x2f0] sm:$0xff]
        %v290 = vld [vmem:[%s159 + $0x2f8] sm:$0xff]
        %v291 = vld [vmem:[%s159 + $0x300] sm:$0xff]
        %v292 = vld [vmem:[%s159 + $0x308] sm:$0xff]
        %v293 = vld [vmem:[%s159 + $0x310] sm:$0xff]
        %v294 = vld [vmem:[%s159 + $0x318] sm:$0xff]
        %v295 = vld [vmem:[%s159 + $0x320] sm:$0xff]
        %v296 = vld [vmem:[%s159 + $0x328] sm:$0xff]
        %v297 = vld [vmem:[%s159 + $0x330] sm:$0xff]
        %v298 = vld [vmem:[%s159 + $0x338] sm:$0xff]
        %v299 = vld [vmem:[%s159 + $0x340] sm:$0xff]
        %v300 = vld [vmem:[%s159 + $0x348] sm:$0xff]
        %v301 = vld [vmem:[%s159 + $0x350] sm:$0xff]
        %v302 = vld [vmem:[%s159 + $0x358] sm:$0xff]
        %v303 = vld [vmem:[%s159 + $0x360] sm:$0xff]
        %v304 = vld [vmem:[%s159 + $0x368] sm:$0xff]
        %v305 = vld [vmem:[%s159 + $0x370] sm:$0xff]
        %v306 = vld [vmem:[%s159 + $0x378] sm:$0xff]
        %v307 = vld [vmem:[%s159 + $0x380] sm:$0xff]
        %v308 = vld [vmem:[%s159 + $0x388] sm:$0xff]
        %v309 = vld [vmem:[%s159 + $0x390] sm:$0xff]
        %v310 = vld [vmem:[%s159 + $0x398] sm:$0xff]
        %v311 = vld [vmem:[%s159 + $0x3a0] sm:$0xff]
        %v312 = vld [vmem:[%s159 + $0x3a8] sm:$0xff]
        %v313 = vld [vmem:[%s159 + $0x3b0] sm:$0xff]
        %v314 = vld [vmem:[%s159 + $0x3b8] sm:$0xff]
        %v315 = vld [vmem:[%s159 + $0x3c0] sm:$0xff]
        %v316 = vld [vmem:[%s159 + $0x3c8] sm:$0xff]
        %v317 = vld [vmem:[%s159 + $0x3d0] sm:$0xff]
        %v318 = vld [vmem:[%s159 + $0x3d8] sm:$0xff]
        %v319 = vld [vmem:[%s159 + $0x3e0] sm:$0xff]
        %v320 = vld [vmem:[%s159 + $0x3e8] sm:$0xff]
        %v321 = vld [vmem:[%s159 + $0x3f0] sm:$0xff]
        %v322 = vld [vmem:[%s159 + $0x3f8] sm:$0xff]
        %324 = vst [vmem:[#allocation1] ss:$9 sm:$0xff] %v193
        %v325 = vld [vmem:[#allocation1] sm:$0xff]
        %v326 = vld [vmem:[#allocation1 + $0x9] sm:$0xff]
        %v327 = vld [vmem:[#allocation1 + $0x12] sm:$0xff]
        %v328 = vld [vmem:[#allocation1 + $0x1b] sm:$0xff]
        %v461 = vunpack.c.l.b16 %v195
        %v462 = vunpack.c.h.b16 %v195
        %v463 = vunpack.c.l.b16 %v196
        %v464 = vunpack.c.h.b16 %v196
        %v465 = vunpack.c.l.b16 %v197
        %v466 = vunpack.c.h.b16 %v197
        %v467 = vunpack.c.l.b16 %v198
        %v468 = vunpack.c.h.b16 %v198
        %v469 = vunpack.c.l.b16 %v199
        %v470 = vunpack.c.h.b16 %v199
        %v471 = vunpack.c.l.b16 %v200
        %v472 = vunpack.c.h.b16 %v200
        %v473 = vunpack.c.l.b16 %v201
        %v474 = vunpack.c.h.b16 %v201
        %v475 = vunpack.c.l.b16 %v202
        %v476 = vunpack.c.h.b16 %v202
        %v477 = vunpack.c.l.b16 %v203
        %v478 = vunpack.c.h.b16 %v203
        %v479 = vunpack.c.l.b16 %v204
        %v480 = vunpack.c.h.b16 %v204
        %v481 = vunpack.c.l.b16 %v205
        %v482 = vunpack.c.h.b16 %v205
        %v483 = vunpack.c.l.b16 %v206
        %v484 = vunpack.c.h.b16 %v206
        %v485 = vunpack.c.l.b16 %v207
        %v486 = vunpack.c.h.b16 %v207
        %v487 = vunpack.c.l.b16 %v208
        %v488 = vunpack.c.h.b16 %v208
        %v489 = vunpack.c.l.b16 %v209
        %v490 = vunpack.c.h.b16 %v209
        %v491 = vunpack.c.l.b16 %v210
        %v492 = vunpack.c.h.b16 %v210
        %v493 = vunpack.c.l.b16 %v211
        %v494 = vunpack.c.h.b16 %v211
        %v495 = vunpack.c.l.b16 %v212
        %v496 = vunpack.c.h.b16 %v212
        %v497 = vunpack.c.l.b16 %v213
        %v498 = vunpack.c.h.b16 %v213
        %v499 = vunpack.c.l.b16 %v214
        %v500 = vunpack.c.h.b16 %v214
        %v501 = vunpack.c.l.b16 %v215
        %v502 = vunpack.c.h.b16 %v215
        %v503 = vunpack.c.l.b16 %v216
        %v504 = vunpack.c.h.b16 %v216
        %v505 = vunpack.c.l.b16 %v217
        %v506 = vunpack.c.h.b16 %v217
        %v507 = vunpack.c.l.b16 %v218
        %v508 = vunpack.c.h.b16 %v218
        %v509 = vunpack.c.l.b16 %v219
        %v510 = vunpack.c.h.b16 %v219
        %v511 = vunpack.c.l.b16 %v220
        %v512 = vunpack.c.h.b16 %v220
        %v513 = vunpack.c.l.b16 %v221
        %v514 = vunpack.c.h.b16 %v221
        %v515 = vunpack.c.l.b16 %v222
        %v516 = vunpack.c.h.b16 %v222
        %v517 = vunpack.c.l.b16 %v223
        %v518 = vunpack.c.h.b16 %v223
        %v519 = vunpack.c.l.b16 %v224
        %v520 = vunpack.c.h.b16 %v224
        %v521 = vunpack.c.l.b16 %v225
        %v522 = vunpack.c.h.b16 %v225
        %v523 = vunpack.c.l.b16 %v226
        %v524 = vunpack.c.h.b16 %v226
        %v525 = vunpack.c.l.b16 %v227
        %v526 = vunpack.c.h.b16 %v227
        %v527 = vunpack.c.l.b16 %v228
        %v528 = vunpack.c.h.b16 %v228
        %v529 = vunpack.c.l.b16 %v229
        %v530 = vunpack.c.h.b16 %v229
        %v531 = vunpack.c.l.b16 %v230
        %v532 = vunpack.c.h.b16 %v230
        %v533 = vunpack.c.l.b16 %v231
        %v534 = vunpack.c.h.b16 %v231
        %v535 = vunpack.c.l.b16 %v232
        %v536 = vunpack.c.h.b16 %v232
        %v537 = vunpack.c.l.b16 %v233
        %v538 = vunpack.c.h.b16 %v233
        %v539 = vunpack.c.l.b16 %v234
        %v540 = vunpack.c.h.b16 %v234
        %v541 = vunpack.c.l.b16 %v235
        %v542 = vunpack.c.h.b16 %v235
        %v543 = vunpack.c.l.b16 %v236
        %v544 = vunpack.c.h.b16 %v236
        %v545 = vunpack.c.l.b16 %v237
        %v546 = vunpack.c.h.b16 %v237
        %v547 = vunpack.c.l.b16 %v238
        %v548 = vunpack.c.h.b16 %v238
        %v549 = vunpack.c.l.b16 %v239
        %v550 = vunpack.c.h.b16 %v239
        %v551 = vunpack.c.l.b16 %v240
        %v552 = vunpack.c.h.b16 %v240
        %v553 = vunpack.c.l.b16 %v241
        %v554 = vunpack.c.h.b16 %v241
        %v555 = vunpack.c.l.b16 %v242
        %v556 = vunpack.c.h.b16 %v242
        %v557 = vunpack.c.l.b16 %v243
        %v558 = vunpack.c.h.b16 %v243
        %v559 = vunpack.c.l.b16 %v244
        %v560 = vunpack.c.h.b16 %v244
        %v561 = vunpack.c.l.b16 %v245
        %v562 = vunpack.c.h.b16 %v245
        %v563 = vunpack.c.l.b16 %v246
        %v564 = vunpack.c.h.b16 %v246
        %v565 = vunpack.c.l.b16 %v247
        %v566 = vunpack.c.h.b16 %v247
        %v567 = vunpack.c.l.b16 %v248
        %v568 = vunpack.c.h.b16 %v248
        %v569 = vunpack.c.l.b16 %v249
        %v570 = vunpack.c.h.b16 %v249
        %v571 = vunpack.c.l.b16 %v250
        %v572 = vunpack.c.h.b16 %v250
        %v573 = vunpack.c.l.b16 %v251
        %v574 = vunpack.c.h.b16 %v251
        %v575 = vunpack.c.l.b16 %v252
        %v576 = vunpack.c.h.b16 %v252
        %v577 = vunpack.c.l.b16 %v253
        %v578 = vunpack.c.h.b16 %v253
        %v579 = vunpack.c.l.b16 %v254
        %v580 = vunpack.c.h.b16 %v254
        %v581 = vunpack.c.l.b16 %v255
        %v582 = vunpack.c.h.b16 %v255
        %v583 = vunpack.c.l.b16 %v256
        %v584 = vunpack.c.h.b16 %v256
        %v585 = vunpack.c.l.b16 %v257
        %v586 = vunpack.c.h.b16 %v257
        %v587 = vunpack.c.l.b16 %v258
        %v588 = vunpack.c.h.b16 %v258
        %v589 = vunpack.c.l.b16 %v259
        %v590 = vunpack.c.h.b16 %v259
        %v591 = vunpack.c.l.b16 %v260
        %v592 = vunpack.c.h.b16 %v260
        %v593 = vunpack.c.l.b16 %v261
        %v594 = vunpack.c.h.b16 %v261
        %v595 = vunpack.c.l.b16 %v262
        %v596 = vunpack.c.h.b16 %v262
        %v597 = vunpack.c.l.b16 %v263
        %v598 = vunpack.c.h.b16 %v263
        %v599 = vunpack.c.l.b16 %v264
        %v600 = vunpack.c.h.b16 %v264
        %v601 = vunpack.c.l.b16 %v265
        %v602 = vunpack.c.h.b16 %v265
        %v603 = vunpack.c.l.b16 %v266
        %v604 = vunpack.c.h.b16 %v266
        %v605 = vunpack.c.l.b16 %v267
        %v606 = vunpack.c.h.b16 %v267
        %v607 = vunpack.c.l.b16 %v268
        %v608 = vunpack.c.h.b16 %v268
        %v609 = vunpack.c.l.b16 %v269
        %v610 = vunpack.c.h.b16 %v269
        %v611 = vunpack.c.l.b16 %v270
        %v612 = vunpack.c.h.b16 %v270
        %v613 = vunpack.c.l.b16 %v271
        %v614 = vunpack.c.h.b16 %v271
        %v615 = vunpack.c.l.b16 %v272
        %v616 = vunpack.c.h.b16 %v272
        %v617 = vunpack.c.l.b16 %v273
        %v618 = vunpack.c.h.b16 %v273
        %v619 = vunpack.c.l.b16 %v274
        %v620 = vunpack.c.h.b16 %v274
        %v621 = vunpack.c.l.b16 %v275
        %v622 = vunpack.c.h.b16 %v275
        %v623 = vunpack.c.l.b16 %v276
        %v624 = vunpack.c.h.b16 %v276
        %v625 = vunpack.c.l.b16 %v277
        %v626 = vunpack.c.h.b16 %v277
        %v627 = vunpack.c.l.b16 %v278
        %v628 = vunpack.c.h.b16 %v278
        %v629 = vunpack.c.l.b16 %v279
        %v630 = vunpack.c.h.b16 %v279
        %v631 = vunpack.c.l.b16 %v280
        %v632 = vunpack.c.h.b16 %v280
        %v633 = vunpack.c.l.b16 %v281
        %v634 = vunpack.c.h.b16 %v281
        %v635 = vunpack.c.l.b16 %v282
        %v636 = vunpack.c.h.b16 %v282
        %v637 = vunpack.c.l.b16 %v283
        %v638 = vunpack.c.h.b16 %v283
        %v639 = vunpack.c.l.b16 %v284
        %v640 = vunpack.c.h.b16 %v284
        %v641 = vunpack.c.l.b16 %v285
        %v642 = vunpack.c.h.b16 %v285
        %v643 = vunpack.c.l.b16 %v286
        %v644 = vunpack.c.h.b16 %v286
        %v645 = vunpack.c.l.b16 %v287
        %v646 = vunpack.c.h.b16 %v287
        %v647 = vunpack.c.l.b16 %v288
        %v648 = vunpack.c.h.b16 %v288
        %v649 = vunpack.c.l.b16 %v289
        %v650 = vunpack.c.h.b16 %v289
        %v651 = vunpack.c.l.b16 %v290
        %v652 = vunpack.c.h.b16 %v290
        %v653 = vunpack.c.l.b16 %v291
        %v654 = vunpack.c.h.b16 %v291
        %v655 = vunpack.c.l.b16 %v292
        %v656 = vunpack.c.h.b16 %v292
        %v657 = vunpack.c.l.b16 %v293
        %v658 = vunpack.c.h.b16 %v293
        %v659 = vunpack.c.l.b16 %v294
        %v660 = vunpack.c.h.b16 %v294
        %v661 = vunpack.c.l.b16 %v295
        %v662 = vunpack.c.h.b16 %v295
        %v663 = vunpack.c.l.b16 %v296
        %v664 = vunpack.c.h.b16 %v296
        %v665 = vunpack.c.l.b16 %v297
        %v666 = vunpack.c.h.b16 %v297
        %v667 = vunpack.c.l.b16 %v298
        %v668 = vunpack.c.h.b16 %v298
        %v669 = vunpack.c.l.b16 %v299
        %v670 = vunpack.c.h.b16 %v299
        %v671 = vunpack.c.l.b16 %v300
        %v672 = vunpack.c.h.b16 %v300
        %v673 = vunpack.c.l.b16 %v301
        %v674 = vunpack.c.h.b16 %v301
        %v675 = vunpack.c.l.b16 %v302
        %v676 = vunpack.c.h.b16 %v302
        %v677 = vunpack.c.l.b16 %v303
        %v678 = vunpack.c.h.b16 %v303
        %v679 = vunpack.c.l.b16 %v304
        %v680 = vunpack.c.h.b16 %v304
        %v681 = vunpack.c.l.b16 %v305
        %v682 = vunpack.c.h.b16 %v305
        %v683 = vunpack.c.l.b16 %v306
        %v684 = vunpack.c.h.b16 %v306
        %v685 = vunpack.c.l.b16 %v307
        %v686 = vunpack.c.h.b16 %v307
        %v687 = vunpack.c.l.b16 %v308
        %v688 = vunpack.c.h.b16 %v308
        %v689 = vunpack.c.l.b16 %v309
        %v690 = vunpack.c.h.b16 %v309
        %v691 = vunpack.c.l.b16 %v310
        %v692 = vunpack.c.h.b16 %v310
        %v693 = vunpack.c.l.b16 %v311
        %v694 = vunpack.c.h.b16 %v311
        %v695 = vunpack.c.l.b16 %v312
        %v696 = vunpack.c.h.b16 %v312
        %v697 = vunpack.c.l.b16 %v313
        %v698 = vunpack.c.h.b16 %v313
        %v699 = vunpack.c.l.b16 %v314
        %v700 = vunpack.c.h.b16 %v314
        %v701 = vunpack.c.l.b16 %v315
        %v702 = vunpack.c.h.b16 %v315
        %v703 = vunpack.c.l.b16 %v316
        %v704 = vunpack.c.h.b16 %v316
        %v705 = vunpack.c.l.b16 %v317
        %v706 = vunpack.c.h.b16 %v317
        %v707 = vunpack.c.l.b16 %v318
        %v708 = vunpack.c.h.b16 %v318
        %v709 = vunpack.c.l.b16 %v319
        %v710 = vunpack.c.h.b16 %v319
        %v711 = vunpack.c.l.b16 %v320
        %v712 = vunpack.c.h.b16 %v320
        %v713 = vunpack.c.l.b16 %v321
        %v714 = vunpack.c.h.b16 %v321
        %v715 = vunpack.c.l.b16 %v322
        %v716 = vunpack.c.h.b16 %v322
        %v717 = vpack.c.b16 %v465, %v461
        %v718 = vpack.c.b16 %v466, %v462
        %v719 = vpack.c.b16 %v467, %v463
        %v720 = vpack.c.b16 %v468, %v464
        %v721 = vpack.c.b16 %v473, %v469
        %v722 = vpack.c.b16 %v474, %v470
        %v723 = vpack.c.b16 %v475, %v471
        %v724 = vpack.c.b16 %v476, %v472
        %v725 = vpack.c.b16 %v481, %v477
        %v726 = vpack.c.b16 %v482, %v478
        %v727 = vpack.c.b16 %v483, %v479
        %v728 = vpack.c.b16 %v484, %v480
        %v729 = vpack.c.b16 %v489, %v485
        %v730 = vpack.c.b16 %v490, %v486
        %v731 = vpack.c.b16 %v491, %v487
        %v732 = vpack.c.b16 %v492, %v488
        %v733 = vpack.c.b16 %v497, %v493
        %v734 = vpack.c.b16 %v498, %v494
        %v735 = vpack.c.b16 %v499, %v495
        %v736 = vpack.c.b16 %v500, %v496
        %v737 = vpack.c.b16 %v505, %v501
        %v738 = vpack.c.b16 %v506, %v502
        %v739 = vpack.c.b16 %v507, %v503
        %v740 = vpack.c.b16 %v508, %v504
        %v741 = vpack.c.b16 %v513, %v509
        %v742 = vpack.c.b16 %v514, %v510
        %v743 = vpack.c.b16 %v515, %v511
        %v744 = vpack.c.b16 %v516, %v512
        %v745 = vpack.c.b16 %v521, %v517
        %v746 = vpack.c.b16 %v522, %v518
        %v747 = vpack.c.b16 %v523, %v519
        %v748 = vpack.c.b16 %v524, %v520
        %v749 = vpack.c.b16 %v529, %v525
        %v750 = vpack.c.b16 %v530, %v526
        %v751 = vpack.c.b16 %v531, %v527
        %v752 = vpack.c.b16 %v532, %v528
        %v753 = vpack.c.b16 %v537, %v533
        %v754 = vpack.c.b16 %v538, %v534
        %v755 = vpack.c.b16 %v539, %v535
        %v756 = vpack.c.b16 %v540, %v536
        %v757 = vpack.c.b16 %v545, %v541
        %v758 = vpack.c.b16 %v546, %v542
        %v759 = vpack.c.b16 %v547, %v543
        %v760 = vpack.c.b16 %v548, %v544
        %v761 = vpack.c.b16 %v553, %v549
        %v762 = vpack.c.b16 %v554, %v550
        %v763 = vpack.c.b16 %v555, %v551
        %v764 = vpack.c.b16 %v556, %v552
        %v765 = vpack.c.b16 %v561, %v557
        %v766 = vpack.c.b16 %v562, %v558
        %v767 = vpack.c.b16 %v563, %v559
        %v768 = vpack.c.b16 %v564, %v560
        %v769 = vpack.c.b16 %v569, %v565
        %v770 = vpack.c.b16 %v570, %v566
        %v771 = vpack.c.b16 %v571, %v567
        %v772 = vpack.c.b16 %v572, %v568
        %v773 = vpack.c.b16 %v577, %v573
        %v774 = vpack.c.b16 %v578, %v574
        %v775 = vpack.c.b16 %v579, %v575
        %v776 = vpack.c.b16 %v580, %v576
        %v777 = vpack.c.b16 %v585, %v581
        %v778 = vpack.c.b16 %v586, %v582
        %v779 = vpack.c.b16 %v587, %v583
        %v780 = vpack.c.b16 %v588, %v584
        %v781 = vpack.c.b16 %v593, %v589
        %v782 = vpack.c.b16 %v594, %v590
        %v783 = vpack.c.b16 %v595, %v591
        %v784 = vpack.c.b16 %v596, %v592
        %v785 = vpack.c.b16 %v601, %v597
        %v786 = vpack.c.b16 %v602, %v598
        %v787 = vpack.c.b16 %v603, %v599
        %v788 = vpack.c.b16 %v604, %v600
        %v789 = vpack.c.b16 %v609, %v605
        %v790 = vpack.c.b16 %v610, %v606
        %v791 = vpack.c.b16 %v611, %v607
        %v792 = vpack.c.b16 %v612, %v608
        %v793 = vpack.c.b16 %v617, %v613
        %v794 = vpack.c.b16 %v618, %v614
        %v795 = vpack.c.b16 %v619, %v615
        %v796 = vpack.c.b16 %v620, %v616
        %v797 = vpack.c.b16 %v625, %v621
        %v798 = vpack.c.b16 %v626, %v622
        %v799 = vpack.c.b16 %v627, %v623
        %v800 = vpack.c.b16 %v628, %v624
        %v801 = vpack.c.b16 %v633, %v629
        %v802 = vpack.c.b16 %v634, %v630
        %v803 = vpack.c.b16 %v635, %v631
        %v804 = vpack.c.b16 %v636, %v632
        %v805 = vpack.c.b16 %v641, %v637
        %v806 = vpack.c.b16 %v642, %v638
        %v807 = vpack.c.b16 %v643, %v639
        %v808 = vpack.c.b16 %v644, %v640
        %v809 = vpack.c.b16 %v649, %v645
        %v810 = vpack.c.b16 %v650, %v646
        %v811 = vpack.c.b16 %v651, %v647
        %v812 = vpack.c.b16 %v652, %v648
        %v813 = vpack.c.b16 %v657, %v653
        %v814 = vpack.c.b16 %v658, %v654
        %v815 = vpack.c.b16 %v659, %v655
        %v816 = vpack.c.b16 %v660, %v656
        %v817 = vpack.c.b16 %v665, %v661
        %v818 = vpack.c.b16 %v666, %v662
        %v819 = vpack.c.b16 %v667, %v663
        %v820 = vpack.c.b16 %v668, %v664
        %v821 = vpack.c.b16 %v673, %v669
        %v822 = vpack.c.b16 %v674, %v670
        %v823 = vpack.c.b16 %v675, %v671
        %v824 = vpack.c.b16 %v676, %v672
        %v825 = vpack.c.b16 %v681, %v677
        %v826 = vpack.c.b16 %v682, %v678
        %v827 = vpack.c.b16 %v683, %v679
        %v828 = vpack.c.b16 %v684, %v680
        %v829 = vpack.c.b16 %v689, %v685
        %v830 = vpack.c.b16 %v690, %v686
        %v831 = vpack.c.b16 %v691, %v687
        %v832 = vpack.c.b16 %v692, %v688
        %v833 = vpack.c.b16 %v697, %v693
        %v834 = vpack.c.b16 %v698, %v694
        %v835 = vpack.c.b16 %v699, %v695
        %v836 = vpack.c.b16 %v700, %v696
        %v837 = vpack.c.b16 %v705, %v701
        %v838 = vpack.c.b16 %v706, %v702
        %v839 = vpack.c.b16 %v707, %v703
        %v840 = vpack.c.b16 %v708, %v704
        %v841 = vpack.c.b16 %v713, %v709
        %v842 = vpack.c.b16 %v714, %v710
        %v843 = vpack.c.b16 %v715, %v711
        %v844 = vpack.c.b16 %v716, %v712
        %973 = vmatpush.bf16.msra.mxu0 %v745
        %974 = vmatpush.bf16.msra.mxu0 %v741
        %975 = vmatpush.bf16.msra.mxu0 %v737
        %976 = vmatpush.bf16.msra.mxu0 %v733
        %977 = vmatpush.bf16.msra.mxu0 %v729
        %978 = vmatpush.bf16.msra.mxu0 %v725
        %979 = vmatpush.bf16.msra.mxu0 %v721
        %980 = vmatpush.bf16.msra.mxu0 %v717
        %981 = vmatmul.bf16.gmra.mxu0 %v325
        %v982 = vpop.f32.mrf.mxu0
        %v983 = vadd.f32 0.0, %v982
        %v984 = vpop.f32.mrf.mxu0
        %985 = vdwg.mxu0
        %986 = vmatpush.bf16.msra.mxu0 %v777
        %987 = vmatpush.bf16.msra.mxu0 %v773
        %988 = vmatpush.bf16.msra.mxu0 %v769
        %989 = vmatpush.bf16.msra.mxu0 %v765
        %990 = vmatpush.bf16.msra.mxu0 %v761
        %991 = vmatpush.bf16.msra.mxu0 %v757
        %992 = vmatpush.bf16.msra.mxu0 %v753
        %993 = vmatpush.bf16.msra.mxu0 %v749
        %994 = vmatmul.bf16.gmra.mxu0 %v326
        %v995 = vpop.f32.mrf.mxu0
        %v996 = vadd.f32 %v983, %v995
        %v997 = vpop.f32.mrf.mxu0
        %998 = vdwg.mxu0
        %999 = vmatpush.bf16.msra.mxu0 %v809
        %1000 = vmatpush.bf16.msra.mxu0 %v805
        %1001 = vmatpush.bf16.msra.mxu0 %v801
        %1002 = vmatpush.bf16.msra.mxu0 %v797
        %1003 = vmatpush.bf16.msra.mxu0 %v793
        %1004 = vmatpush.bf16.msra.mxu0 %v789
        %1005 = vmatpush.bf16.msra.mxu0 %v785
        %1006 = vmatpush.bf16.msra.mxu0 %v781
        %1007 = vmatmul.bf16.gmra.mxu0 %v327
        %v1008 = vpop.f32.mrf.mxu0
        %v1009 = vadd.f32 %v996, %v1008
        %v1010 = vpop.f32.mrf.mxu0
        %1011 = vdwg.mxu0
        %1012 = vmatpush.bf16.msra.mxu0 %v841
        %1013 = vmatpush.bf16.msra.mxu0 %v837
        %1014 = vmatpush.bf16.msra.mxu0 %v833
        %1015 = vmatpush.bf16.msra.mxu0 %v829
        %1016 = vmatpush.bf16.msra.mxu0 %v825
        %1017 = vmatpush.bf16.msra.mxu0 %v821
        %1018 = vmatpush.bf16.msra.mxu0 %v817
        %1019 = vmatpush.bf16.msra.mxu0 %v813
        %1020 = vmatmul.bf16.gmra.mxu0 %v328
        %v1021 = vpop.f32.mrf.mxu0
        %v1022 = vadd.f32 %v1009, %v1021
        %v1023 = vpop.f32.mrf.mxu0
        %1024 = vdwg.mxu0
        %1025 = vmatpush.bf16.msra.mxu0 %v746
        %1026 = vmatpush.bf16.msra.mxu0 %v742
        %1027 = vmatpush.bf16.msra.mxu0 %v738
        %1028 = vmatpush.bf16.msra.mxu0 %v734
        %1029 = vmatpush.bf16.msra.mxu0 %v730
        %1030 = vmatpush.bf16.msra.mxu0 %v726
        %1031 = vmatpush.bf16.msra.mxu0 %v722
        %1032 = vmatpush.bf16.msra.mxu0 %v718
        %1033 = vmatmul.bf16.gmra.mxu0 %v325
        %v1034 = vpop.f32.mrf.mxu0
        %v1035 = vadd.f32 0.0, %v1034
        %v1036 = vpop.f32.mrf.mxu0
        %1037 = vdwg.mxu0
        %1038 = vmatpush.bf16.msra.mxu0 %v778
        %1039 = vmatpush.bf16.msra.mxu0 %v774
        %1040 = vmatpush.bf16.msra.mxu0 %v770
        %1041 = vmatpush.bf16.msra.mxu0 %v766
        %1042 = vmatpush.bf16.msra.mxu0 %v762
        %1043 = vmatpush.bf16.msra.mxu0 %v758
        %1044 = vmatpush.bf16.msra.mxu0 %v754
        %1045 = vmatpush.bf16.msra.mxu0 %v750
        %1046 = vmatmul.bf16.gmra.mxu0 %v326
        %v1047 = vpop.f32.mrf.mxu0
        %v1048 = vadd.f32 %v1035, %v1047
        %v1049 = vpop.f32.mrf.mxu0
        %1050 = vdwg.mxu0
        %1051 = vmatpush.bf16.msra.mxu0 %v810
        %1052 = vmatpush.bf16.msra.mxu0 %v806
        %1053 = vmatpush.bf16.msra.mxu0 %v802
        %1054 = vmatpush.bf16.msra.mxu0 %v798
        %1055 = vmatpush.bf16.msra.mxu0 %v794
        %1056 = vmatpush.bf16.msra.mxu0 %v790
        %1057 = vmatpush.bf16.msra.mxu0 %v786
        %1058 = vmatpush.bf16.msra.mxu0 %v782
        %1059 = vmatmul.bf16.gmra.mxu0 %v327
        %v1060 = vpop.f32.mrf.mxu0
        %v1061 = vadd.f32 %v1048, %v1060
        %v1062 = vpop.f32.mrf.mxu0
        %1063 = vdwg.mxu0
        %1064 = vmatpush.bf16.msra.mxu0 %v842
        %1065 = vmatpush.bf16.msra.mxu0 %v838
        %1066 = vmatpush.bf16.msra.mxu0 %v834
        %1067 = vmatpush.bf16.msra.mxu0 %v830
        %1068 = vmatpush.bf16.msra.mxu0 %v826
        %1069 = vmatpush.bf16.msra.mxu0 %v822
        %1070 = vmatpush.bf16.msra.mxu0 %v818
        %1071 = vmatpush.bf16.msra.mxu0 %v814
        %1072 = vmatmul.bf16.gmra.mxu0 %v328
        %v1073 = vpop.f32.mrf.mxu0
        %v1074 = vadd.f32 %v1061, %v1073
        %v1075 = vpop.f32.mrf.mxu0
        %1076 = vdwg.mxu0
        %1077 = vmatpush.bf16.msra.mxu0 %v747
        %1078 = vmatpush.bf16.msra.mxu0 %v743
        %1079 = vmatpush.bf16.msra.mxu0 %v739
        %1080 = vmatpush.bf16.msra.mxu0 %v735
        %1081 = vmatpush.bf16.msra.mxu0 %v731
        %1082 = vmatpush.bf16.msra.mxu0 %v727
        %1083 = vmatpush.bf16.msra.mxu0 %v723
        %1084 = vmatpush.bf16.msra.mxu0 %v719
        %1085 = vmatmul.bf16.gmra.mxu0 %v325
        %v1086 = vpop.f32.mrf.mxu0
        %v1087 = vadd.f32 0.0, %v1086
        %v1088 = vpop.f32.mrf.mxu0
        %1089 = vdwg.mxu0
        %1090 = vmatpush.bf16.msra.mxu0 %v779
        %1091 = vmatpush.bf16.msra.mxu0 %v775
        %1092 = vmatpush.bf16.msra.mxu0 %v771
        %1093 = vmatpush.bf16.msra.mxu0 %v767
        %1094 = vmatpush.bf16.msra.mxu0 %v763
        %1095 = vmatpush.bf16.msra.mxu0 %v759
        %1096 = vmatpush.bf16.msra.mxu0 %v755
        %1097 = vmatpush.bf16.msra.mxu0 %v751
        %1098 = vmatmul.bf16.gmra.mxu0 %v326
        %v1099 = vpop.f32.mrf.mxu0
        %v1100 = vadd.f32 %v1087, %v1099
        %v1101 = vpop.f32.mrf.mxu0
        %1102 = vdwg.mxu0
        %1103 = vmatpush.bf16.msra.mxu0 %v811
        %1104 = vmatpush.bf16.msra.mxu0 %v807
        %1105 = vmatpush.bf16.msra.mxu0 %v803
        %1106 = vmatpush.bf16.msra.mxu0 %v799
        %1107 = vmatpush.bf16.msra.mxu0 %v795
        %1108 = vmatpush.bf16.msra.mxu0 %v791
        %1109 = vmatpush.bf16.msra.mxu0 %v787
        %1110 = vmatpush.bf16.msra.mxu0 %v783
        %1111 = vmatmul.bf16.gmra.mxu0 %v327
        %v1112 = vpop.f32.mrf.mxu0
        %v1113 = vadd.f32 %v1100, %v1112
        %v1114 = vpop.f32.mrf.mxu0
        %1115 = vdwg.mxu0
        %1116 = vmatpush.bf16.msra.mxu0 %v843
        %1117 = vmatpush.bf16.msra.mxu0 %v839
        %1118 = vmatpush.bf16.msra.mxu0 %v835
        %1119 = vmatpush.bf16.msra.mxu0 %v831
        %1120 = vmatpush.bf16.msra.mxu0 %v827
        %1121 = vmatpush.bf16.msra.mxu0 %v823
        %1122 = vmatpush.bf16.msra.mxu0 %v819
        %1123 = vmatpush.bf16.msra.mxu0 %v815
        %1124 = vmatmul.bf16.gmra.mxu0 %v328
        %v1125 = vpop.f32.mrf.mxu0
        %v1126 = vadd.f32 %v1113, %v1125
        %v1127 = vpop.f32.mrf.mxu0
        %1128 = vdwg.mxu0
        %1129 = vmatpush.bf16.msra.mxu0 %v748
        %1130 = vmatpush.bf16.msra.mxu0 %v744
        %1131 = vmatpush.bf16.msra.mxu0 %v740
        %1132 = vmatpush.bf16.msra.mxu0 %v736
        %1133 = vmatpush.bf16.msra.mxu0 %v732
        %1134 = vmatpush.bf16.msra.mxu0 %v728
        %1135 = vmatpush.bf16.msra.mxu0 %v724
        %1136 = vmatpush.bf16.msra.mxu0 %v720
        %1137 = vmatmul.bf16.gmra.mxu0 %v325
        %v1138 = vpop.f32.mrf.mxu0
        %v1139 = vadd.f32 0.0, %v1138
        %v1140 = vpop.f32.mrf.mxu0
        %1141 = vdwg.mxu0
        %1142 = vmatpush.bf16.msra.mxu0 %v780
        %1143 = vmatpush.bf16.msra.mxu0 %v776
        %1144 = vmatpush.bf16.msra.mxu0 %v772
        %1145 = vmatpush.bf16.msra.mxu0 %v768
        %1146 = vmatpush.bf16.msra.mxu0 %v764
        %1147 = vmatpush.bf16.msra.mxu0 %v760
        %1148 = vmatpush.bf16.msra.mxu0 %v756
        %1149 = vmatpush.bf16.msra.mxu0 %v752
        %1150 = vmatmul.bf16.gmra.mxu0 %v326
        %v1151 = vpop.f32.mrf.mxu0
        %v1152 = vadd.f32 %v1139, %v1151
        %v1153 = vpop.f32.mrf.mxu0
        %1154 = vdwg.mxu0
        %1155 = vmatpush.bf16.msra.mxu0 %v812
        %1156 = vmatpush.bf16.msra.mxu0 %v808
        %1157 = vmatpush.bf16.msra.mxu0 %v804
        %1158 = vmatpush.bf16.msra.mxu0 %v800
        %1159 = vmatpush.bf16.msra.mxu0 %v796
        %1160 = vmatpush.bf16.msra.mxu0 %v792
        %1161 = vmatpush.bf16.msra.mxu0 %v788
        %1162 = vmatpush.bf16.msra.mxu0 %v784
        %1163 = vmatmul.bf16.gmra.mxu0 %v327
        %v1164 = vpop.f32.mrf.mxu0
        %v1165 = vadd.f32 %v1152, %v1164
        %v1166 = vpop.f32.mrf.mxu0
        %1167 = vdwg.mxu0
        %1168 = vmatpush.bf16.msra.mxu0 %v844
        %1169 = vmatpush.bf16.msra.mxu0 %v840
        %1170 = vmatpush.bf16.msra.mxu0 %v836
        %1171 = vmatpush.bf16.msra.mxu0 %v832
        %1172 = vmatpush.bf16.msra.mxu0 %v828
        %1173 = vmatpush.bf16.msra.mxu0 %v824
        %1174 = vmatpush.bf16.msra.mxu0 %v820
        %1175 = vmatpush.bf16.msra.mxu0 %v816
        %1176 = vmatmul.bf16.gmra.mxu0 %v328
        %v1177 = vpop.f32.mrf.mxu0
        %v1178 = vadd.f32 %v1165, %v1177
        %v1179 = vpop.f32.mrf.mxu0
        %1180 = vdwg.mxu0
        %v1185 = vrot.slane %v1074, 6
        %v1186 = vrot.slane %v1126, 4
        %v1187 = vrot.slane %v1178, 2
        %vm1188 = vcmask 1041408
        %v1189 = vsel %vm1188, %v1022, %v1185
        %vm1190 = vcmask 1045508
        %v1191 = vsel %vm1190, %v1186, %v1187
        %vm1192 = vcmask 1043456
        %v1193 = vsel %vm1192, %v1189, %v1191
        %v1195 = vadd.f32 %v194, %v1193
        %1196 = vst [vmem:[%s180] sm:$0xff] %v1195
        %s1197 = sand.u32 %s88, 1
        %s1198 = scalar_lea.sflag [#allocation4], %s1197
        %s1199 = sand.u32 %s88, 1
        %s1200 = smul.addr %s1199, 8
        %s1201 = scalar_lea.vmem [#allocation5], %s1200
        // Predicated region
        $region37: #{pallas_adjoint_reconstruct.1} parent=27 // pred_check
          %p1202 = pneg %p98
        $region38: #{pallas_adjoint_reconstruct.1} parent=27 // pred_check_branch
          %1204 = sbr.rel (%p1202) target = $region40
        $region39: #{pallas_adjoint_reconstruct.1} parent=27 // pred_region
          %s1205 = smul.u32 4, %s23
          %1207 = vsyncadd %s1198, 0
          %s1208 = smul.addr %s1205, 2
          %s1209 = scalar_lea.hbm %s2, %s1208
          %s1211 = sshll.u32 %s1201, 4
          %s1212 = int_to_ptr.vmem [resolvable:$true] %s1211
          %s1213 = sshll.u32 %s1209, 4
          %s1214 = int_to_ptr.hbm [resolvable:$true] %s1213
          %1216 = dma.vmem_to_hbm [thread:$0]  %s1212, 128, %s1214, %s1198
        $region40: #{pallas_adjoint_reconstruct.1} parent=27 // pred_fallthru
          _
      $region28: #{pallas_adjoint_reconstruct.1} parent=5 // pred_fallthru
        _
      %p1217 = scmp.le.s32.totalorder 2, %s14
      // Predicated region
      $region41: #{pallas_adjoint_reconstruct.1} parent=5 // pred_check
        %p1218 = pneg %p1217
      $region42: #{pallas_adjoint_reconstruct.1} parent=5 // pred_check_branch
        %1220 = sbr.rel (%p1218) target = $region44
      $region43: #{pallas_adjoint_reconstruct.1} parent=5 // pred_region
        %s1221 = ssub.s32 %s14, 2
        // Predicated region
        $region45: #{pallas_adjoint_reconstruct.1} parent=43 // pred_check
          %p1222 = pneg %p104
        $region46: #{pallas_adjoint_reconstruct.1} parent=43 // pred_check_branch
          %1224 = sbr.rel (%p1222) target = $region48
        $region47: #{pallas_adjoint_reconstruct.1} parent=43 // pred_region
          %s1225 = sand.u32 %s89, 1
          %s1226 = scalar_lea.sflag [#allocation4], %s1225
          %s1227 = sand.u32 %s89, 1
          %s1228 = smul.addr %s1227, 8
          %s1229 = scalar_lea.vmem [#allocation5], %s1228
          %1231 = dma.done %s1226, 128
        $region48: #{pallas_adjoint_reconstruct.1} parent=43 // pred_fallthru
          _
      $region44: #{pallas_adjoint_reconstruct.1} parent=5 // pred_fallthru
        _
    $region6: #{pallas_adjoint_reconstruct.1} parent=1 // loop_footer
      %s18 = sadd.s32 1, %s14
    $region7: #{pallas_adjoint_reconstruct.1} parent=1 // loop_footer_branch
      %13 = sbr.rel target = $region3
    $region8: #{pallas_adjoint_reconstruct.1} parent=1 // loop_exit
      _
    %1232 = vsyncpa [#allocation3], 1
    %s1233 = scalar_lea.sflag [#allocation3], 1
    %1234 = vsyncpa %s1233, 1
    %1235 = vsyncpa [#allocation4], 1
    %s1236 = scalar_lea.sflag [#allocation4], 1
    %1237 = vsyncpa %s1236, 1

</llo_original>
